<compile_context>
chip_gen: v5e
topology: v5e:2x2
jax: 0.10.0
libtpu: 0.0.40
codegen_flags: <defaults>
</compile_context>

<pallas_src>
import functools

import jax
import jax.numpy as jnp
import numpy as np
from jax.experimental import pallas as pl
from jax.experimental.pallas import tpu as pltpu


def _local_gcn_kernel(x_ref, at_ref, dsrc_ref, ddst_ref, w_ref, b_ref, o_ref, *,
                      use_relu, negative_slope):
    """Fused GCNConv row block: out = ddst * (AT_blk @ (dsrc * (X @ W))) + b, leaky_relu.

    x_ref:    (N, Fin)        bf16  all node features (source nodes)
    at_ref:   (tm, N)         bf16  row block of binarized (A+I)^T (0/1 -> exact in bf16)
    dsrc_ref: (N, 1)          f32   D^{-1/2} for all source nodes
    ddst_ref: (tm, 1)         f32   D^{-1/2} for this block's destination nodes
    w_ref:    (Fin, Fout_pad) bf16  lin.weight.T, zero-padded to a 128 multiple
    b_ref:    (1, Fout_pad)   f32   bias, zero-padded
    o_ref:    (tm, Fout_pad)        lane-dense output block
    """
    # Feature transform on the MXU (bf16 operands, f32 accumulation).
    xw = jnp.dot(x_ref[...], w_ref[...], preferred_element_type=jnp.float32)
    # Source-side normalization in f32, cast back to bf16 for the aggregation matmul.
    y = (xw * dsrc_ref[...]).astype(jnp.bfloat16)
    # Neighborhood aggregation: plain (non-transposed) MXU dot on the 0/1 adjacency.
    z = jnp.dot(at_ref[...], y, preferred_element_type=jnp.float32)
    out = z * ddst_ref[...] + b_ref[...]
    if use_relu:
        out = jnp.where(out > 0.0, out, negative_slope * out)   # leaky_relu
    o_ref[...] = out.astype(o_ref.dtype)


def precompute_local_layer_adj(adj):
    """One-time adjacency preprocessing, hoisted out of the per-call path.

    Returns (at_hat, d_inv_sqrt):
      at_hat:     (N, N) bf16, binarized (A+I)^T   (0/1 entries, exact in bf16)
      d_inv_sqrt: (N, 1) f32,  D^{-1/2} with D = in-degree (column sums) of A+I
    """
    n = adj.shape[0]
    a_bin = (adj != 0).astype(jnp.float32)                      # edge_index = adj.nonzero()
    a_hat = jnp.maximum(a_bin, jnp.eye(n, dtype=jnp.float32))   # add_(remaining_)self_loops
    deg = jnp.sum(a_hat, axis=0).reshape(n, 1)                  # in-degree, always >= 1
    d_inv_sqrt = jax.lax.rsqrt(deg)
    return a_hat.T.astype(jnp.bfloat16), d_inv_sqrt


def _pick_row_block(n):
    """Largest power-of-two row block (<= 256) that divides N; falls back to N."""
    for tm in (256, 128, 64, 32, 16, 8):
        if n % tm == 0:
            return tm
    return n


def local_layer_forward(x, adj, w, b, *, use_relu=True, negative_slope=0.01):
    """LocalLayer.forward.

    x:   (B, C, Fin)
    adj: dense (N, N) with N = B*C, or a tuple from precompute_local_layer_adj
         (preferred when adj is static across calls).
    w:   (Fin, Fout) = gcn.lin.weight.T
    b:   (Fout,)
    Returns (B, C, Fout).
    """
    B, C, Fin = x.shape
    N = B * C
    Fout = w.shape[1]

    if isinstance(adj, tuple):
        at_hat, d_inv_sqrt = adj          # already hoisted by the caller
    else:
        assert adj.shape == (N, N), "adj must cover the flattened batch*n_channels nodes"
        at_hat, d_inv_sqrt = precompute_local_layer_adj(adj)

    # Lane-dense output: pad Fout up to a multiple of 128 (zero columns, sliced off below).
    Fout_pad = ((Fout + 127) // 128) * 128
    w_p = jnp.zeros((Fin, Fout_pad), jnp.bfloat16).at[:, :Fout].set(w.astype(jnp.bfloat16))
    b_p = jnp.zeros((1, Fout_pad), jnp.float32).at[:, :Fout].set(
        b.reshape(1, Fout).astype(jnp.float32))

    x2d = x.reshape(N, Fin).astype(jnp.bfloat16)

    tm = _pick_row_block(N)
    grid = (N // tm,)

    # TODO(synk): for very large N (adjacency row block tm*N no longer VMEM-friendly,
    # ~N > 50k), also tile the source/reduction axis as a trailing "arbitrary" grid
    # axis with an f32 accumulator scratch; not needed at these node counts.

    kernel = functools.partial(_local_gcn_kernel, use_relu=use_relu,
                               negative_slope=negative_slope)

    out2d = pl.pallas_call(
        kernel,
        out_shape=jax.ShapeDtypeStruct((N, Fout_pad), x.dtype),
        grid_spec=pltpu.PrefetchScalarGridSpec(
            num_scalar_prefetch=0,
            grid=grid,
            in_specs=[
                pl.BlockSpec((N, Fin), lambda i: (0, 0)),         # x (all source rows)
                pl.BlockSpec((tm, N), lambda i: (i, 0)),          # (A+I)^T row block
                pl.BlockSpec((N, 1), lambda i: (0, 0)),           # D^{-1/2} (sources)
                pl.BlockSpec((tm, 1), lambda i: (i, 0)),          # D^{-1/2} (destinations)
                pl.BlockSpec((Fin, Fout_pad), lambda i: (0, 0)),  # W (padded, bf16)
                pl.BlockSpec((1, Fout_pad), lambda i: (0, 0)),    # bias (padded, f32)
            ],
            out_specs=pl.BlockSpec((tm, Fout_pad), lambda i: (i, 0)),
        ),
        compiler_params=pltpu.CompilerParams(
            dimension_semantics=("parallel",)),   # independent row blocks (v7x 2-TC shard)
    )(x2d, at_hat, d_inv_sqrt, d_inv_sqrt, w_p, b_p)

    return out2d[:, :Fout].reshape(B, C, Fout)


def _reference_f32(x, adj, w, b, *, use_relu=True, negative_slope=0.01):
    """Pure-f32 GCNConv (torch_geometric) semantics."""
    B, C, Fin = x.shape
    N = B * C
    x2d = x.reshape(N, Fin)
    a_hat = jnp.maximum((adj != 0).astype(jnp.float32), jnp.eye(N, dtype=jnp.float32))
    dis = jax.lax.rsqrt(jnp.sum(a_hat, axis=0))
    out = (a_hat * dis[:, None] * dis[None, :]).T @ (x2d @ w) + b
    if use_relu:
        out = jnp.where(out > 0, out, negative_slope * out)
    return out.reshape(B, C, -1)


def _reference_bf16_policy(x, adj, w, b, *, use_relu=True, negative_slope=0.01):
    """Reference using the kernel's exact precision policy:
    bf16 MXU operands, f32 accumulation, f32 degree/rsqrt/scaling/bias."""
    B, C, Fin = x.shape
    N = B * C
    a_hat = jnp.maximum((adj != 0).astype(jnp.float32), jnp.eye(N, dtype=jnp.float32))
    dis = jax.lax.rsqrt(jnp.sum(a_hat, axis=0)).reshape(N, 1)
    xw = jnp.dot(x.reshape(N, Fin).astype(jnp.bfloat16), w.astype(jnp.bfloat16),
                 preferred_element_type=jnp.float32)
    y = (xw * dis).astype(jnp.bfloat16)
    z = jnp.dot(a_hat.T.astype(jnp.bfloat16), y, preferred_element_type=jnp.float32)
    out = z * dis + b.reshape(1, -1)
    if use_relu:
        out = jnp.where(out > 0, out, negative_slope * out)
    return out.astype(x.dtype).reshape(B, C, -1)


if __name__ == "__main__":
    batch = 2
    n_channels = 8
    in_features = 32
    out_features = 64
    N = batch * n_channels

    key = jax.random.PRNGKey(0)
    kx, ka, kw, kb = jax.random.split(key, 4)

    x = jax.random.normal(kx, (batch, n_channels, in_features), dtype=jnp.float32)

    # Deterministic sparse symmetric adjacency over the flattened node set, zero
    # diagonal (GCNConv adds the self loops itself).
    probs = jax.random.uniform(ka, (N, N))
    adj = (probs < 0.3).astype(jnp.float32)
    adj = jnp.maximum(adj, adj.T) * (1.0 - jnp.eye(N, dtype=jnp.float32))

    # GCNConv parameters in right-multiply form (w = lin.weight.T), bias separate.
    scale = 1.0 / np.sqrt(in_features)
    w = jax.random.normal(kw, (in_features, out_features), dtype=jnp.float32) * scale
    b = jax.random.normal(kb, (out_features,), dtype=jnp.float32) * 0.1

    # One-time adjacency precompute, hoisted out of the per-call path.
    adj_pre = precompute_local_layer_adj(adj)

    out = local_layer_forward(x, adj_pre, w, b, use_relu=True)
    out = jax.block_until_ready(out)
    assert out.shape == (batch, n_channels, out_features)

    # Tight check against a reference with the kernel's exact precision policy.
    ref_bf16 = _reference_bf16_policy(x, adj, w, b, use_relu=True)
    np.testing.assert_allclose(np.asarray(out), np.asarray(ref_bf16), rtol=1e-4, atol=1e-4)

    # Loose sanity check vs pure-f32 GCNConv math (difference = bf16 operand rounding only).
    ref_f32 = _reference_f32(x, adj, w, b, use_relu=True)
    np.testing.assert_allclose(np.asarray(out), np.asarray(ref_f32), rtol=5e-2, atol=5e-2)

    print("KERNEL_OK")
</pallas_src>

<mosaic_0001>
module attributes {stable_mosaic.version = 11 : i64} {
  func.func @_local_gcn_kernel(%arg0: i32, %arg1: memref<16x32xbf16, #tpu.memory_space<vmem>>, %arg2: memref<16x16xbf16, #tpu.memory_space<vmem>>, %arg3: memref<16x1xf32, #tpu.memory_space<vmem>>, %arg4: memref<16x1xf32, #tpu.memory_space<vmem>>, %arg5: memref<32x128xbf16, #tpu.memory_space<vmem>>, %arg6: memref<1x128xf32, #tpu.memory_space<vmem>>, %arg7: memref<16x128xf32, #tpu.memory_space<vmem>>) attributes {dimension_semantics = [#tpu.dimension_semantics<parallel>], iteration_bounds = array<i64: 1>, scalar_prefetch = 0 : i64, scratch_operands = 0 : i64, tpu.core_type = #tpu.core_type<tc>, window_params = [{pipeline_mode = #tpu.pipeline_mode<synchronous>, transform_indices = @transform_0, window_bounds = array<i64: 16, 32>}, {transform_indices = @transform_1, window_bounds = array<i64: 16, 16>}, {pipeline_mode = #tpu.pipeline_mode<synchronous>, transform_indices = @transform_2, window_bounds = array<i64: 16, 1>}, {transform_indices = @transform_3, window_bounds = array<i64: 16, 1>}, {pipeline_mode = #tpu.pipeline_mode<synchronous>, transform_indices = @transform_4, window_bounds = array<i64: 32, 128>}, {pipeline_mode = #tpu.pipeline_mode<synchronous>, transform_indices = @transform_5, window_bounds = array<i64: 1, 128>}, {transform_indices = @transform_6, window_bounds = array<i64: 16, 128>}]} {
    %c0 = arith.constant 0 : index
    %c0_0 = arith.constant 0 : index
    %0 = vector.load %arg1[%c0, %c0_0] : memref<16x32xbf16, #tpu.memory_space<vmem>>, vector<16x32xbf16>
    %c0_1 = arith.constant 0 : index
    %c0_2 = arith.constant 0 : index
    %1 = vector.load %arg5[%c0_1, %c0_2] : memref<32x128xbf16, #tpu.memory_space<vmem>>, vector<32x128xbf16>
    %cst = arith.constant dense<0.000000e+00> : vector<16x128xf32>
    %2 = tpu.matmul %0, %1, %cst {dimension_numbers = #tpu.dot_dimension_numbers<[1], [0], [0], [1], [0, 0, 1, 1], [], []>} : vector<16x32xbf16>, vector<32x128xbf16>, vector<16x128xf32> -> vector<16x128xf32>
    %c0_3 = arith.constant 0 : index
    %c0_4 = arith.constant 0 : index
    %3 = vector.load %arg3[%c0_3, %c0_4] : memref<16x1xf32, #tpu.memory_space<vmem>>, vector<16x1xf32>
    %4 = vector.broadcast %3 : vector<16x1xf32> to vector<16x128xf32>
    %5 = arith.mulf %2, %4 : vector<16x128xf32>
    %6 = arith.truncf %5 : vector<16x128xf32> to vector<16x128xbf16>
    %c0_5 = arith.constant 0 : index
    %c0_6 = arith.constant 0 : index
    %7 = vector.load %arg2[%c0_5, %c0_6] : memref<16x16xbf16, #tpu.memory_space<vmem>>, vector<16x16xbf16>
    %cst_7 = arith.constant dense<0.000000e+00> : vector<16x128xf32>
    %8 = tpu.matmul %7, %6, %cst_7 {dimension_numbers = #tpu.dot_dimension_numbers<[1], [0], [0], [1], [0, 0, 1, 1], [], []>} : vector<16x16xbf16>, vector<16x128xbf16>, vector<16x128xf32> -> vector<16x128xf32>
    %c0_8 = arith.constant 0 : index
    %c0_9 = arith.constant 0 : index
    %9 = vector.load %arg4[%c0_8, %c0_9] : memref<16x1xf32, #tpu.memory_space<vmem>>, vector<16x1xf32>
    %10 = vector.broadcast %9 : vector<16x1xf32> to vector<16x128xf32>
    %11 = arith.mulf %8, %10 : vector<16x128xf32>
    %c0_10 = arith.constant 0 : index
    %c0_11 = arith.constant 0 : index
    %12 = vector.load %arg6[%c0_10, %c0_11] : memref<1x128xf32, #tpu.memory_space<vmem>>, vector<1x128xf32>
    %13 = vector.broadcast %12 : vector<1x128xf32> to vector<16x128xf32>
    %14 = arith.addf %11, %13 : vector<16x128xf32>
    %cst_12 = arith.constant 0.000000e+00 : f32
    %15 = vector.broadcast %cst_12 : f32 to vector<16x128xf32>
    %16 = arith.cmpf ogt, %14, %15 : vector<16x128xf32>
    %cst_13 = arith.constant 0.00999999977 : f32
    %17 = vector.broadcast %cst_13 : f32 to vector<16x128xf32>
    %18 = arith.mulf %17, %14 : vector<16x128xf32>
    %19 = arith.select %16, %14, %18 : vector<16x128xi1>, vector<16x128xf32>
    %c0_14 = arith.constant 0 : index
    %c0_15 = arith.constant 0 : index
    %20 = vector.load %arg7[%c0_14, %c0_15] : memref<16x128xf32, #tpu.memory_space<vmem>>, vector<16x128xf32>
    tpu.vector_store %arg7[%c0_14, %c0_15], %19 {strides = array<i32>} : memref<16x128xf32, #tpu.memory_space<vmem>>, vector<16x128xf32>,
    return
  }
  func.func @transform_0(%arg0: i32) -> (i32, i32) {
    %c0_i32 = arith.constant 0 : i32
    %c0_i32_0 = arith.constant 0 : i32
    %c0_i32_1 = arith.constant 0 : i32
    return %c0_i32, %c0_i32_0 : i32, i32
  }
  func.func @transform_1(%arg0: i32) -> (i32, i32) {
    %c0_i32 = arith.constant 0 : i32
    %c0_i32_0 = arith.constant 0 : i32
    return %arg0, %c0_i32 : i32, i32
  }
  func.func @transform_2(%arg0: i32) -> (i32, i32) {
    %c0_i32 = arith.constant 0 : i32
    %c0_i32_0 = arith.constant 0 : i32
    %c0_i32_1 = arith.constant 0 : i32
    return %c0_i32, %c0_i32_0 : i32, i32
  }
  func.func @transform_3(%arg0: i32) -> (i32, i32) {
    %c0_i32 = arith.constant 0 : i32
    %c0_i32_0 = arith.constant 0 : i32
    return %arg0, %c0_i32 : i32, i32
  }
  func.func @transform_4(%arg0: i32) -> (i32, i32) {
    %c0_i32 = arith.constant 0 : i32
    %c0_i32_0 = arith.constant 0 : i32
    %c0_i32_1 = arith.constant 0 : i32
    return %c0_i32, %c0_i32_0 : i32, i32
  }
  func.func @transform_5(%arg0: i32) -> (i32, i32) {
    %c0_i32 = arith.constant 0 : i32
    %c0_i32_0 = arith.constant 0 : i32
    %c0_i32_1 = arith.constant 0 : i32
    return %c0_i32, %c0_i32_0 : i32, i32
  }
  func.func @transform_6(%arg0: i32) -> (i32, i32) {
    %c0_i32 = arith.constant 0 : i32
    %c0_i32_0 = arith.constant 0 : i32
    return %arg0, %c0_i32 : i32, i32
  }
}

</mosaic_0001>

<llo_original>
// kernel: tpu_custom_call.1
$region0: #{tpu_custom_call.1}
  #allocation0 [shape = 'u32[]', space=smem, size = 0x4, offset = 0x4, fixed_abs, tag = 'smem constant byte address 0x4 - core index']
  #allocation1 [shape = 'u32[72,128]{1,0:T(1,128)}', space=vmem, size = 0x9000, scoped, tag = 'internal scratch']
  %s0 = inlined_call_operand.vmem [shape: bf16[16,32], index: 0, kind: input, shape index: {}]
  %s1 = inlined_call_operand.vmem [shape: bf16[16,16], index: 1, kind: input, shape index: {}]
  %s2 = inlined_call_operand.vmem [shape: f32[16,1], index: 2, kind: input, shape index: {}]
  %s3 = inlined_call_operand.vmem [shape: f32[16,1], index: 3, kind: input, shape index: {}]
  %s4 = inlined_call_operand.vmem [shape: bf16[32,128], index: 4, kind: input, shape index: {}]
  %s5 = inlined_call_operand.vmem [shape: f32[1,128], index: 5, kind: input, shape index: {}]
  %s6 = inlined_call_operand.hbm [shape: f32[16,128], index: 6, kind: output, shape index: {}]
  %s7 = sld [smem:[#allocation0]]
  $region34: #{tpu_custom_call.1} parent=0
    _
  %s9 = ssub.s32 1, %s7
  %s10 = scalar_select 0, %s9, %s7
  $region1: #{tpu_custom_call.1} parent=0
    #allocation2 [shape = 'u8[8192]{0}', space=vmem, size = 0x2000, scoped, tag = 'output window, operand 0, single buffered']
    #allocation3 [shape = 's32[1]{0}', space=sflag, size = 0x4, scoped, tag = 'scoped memory for tpu_custom_call.1']
    %11 = vsyncpa [#allocation3], 0
    // Predicated region
    $region2: #{tpu_custom_call.1} parent=1 // pred_check
      _
    $region3: #{tpu_custom_call.1} parent=1 // pred_check_branch
      %13 = sbr.rel (0) target = $region5
    $region4: #{tpu_custom_call.1} parent=1 // pred_region
      _
    $region5: #{tpu_custom_call.1} parent=1 // pred_fallthru
      _
    // Predicated region
    $region6: #{tpu_custom_call.1} parent=1 // pred_check
      _
    $region7: #{tpu_custom_call.1} parent=1 // pred_check_branch
      %15 = sbr.rel (0) target = $region9
    $region8: #{tpu_custom_call.1} parent=1 // pred_region
      _
    $region9: #{tpu_custom_call.1} parent=1 // pred_fallthru
      _
    // Predicated region
    $region10: #{tpu_custom_call.1} parent=1 // pred_check
      _
    $region11: #{tpu_custom_call.1} parent=1 // pred_check_branch
      %17 = sbr.rel (0) target = $region13
    $region12: #{tpu_custom_call.1} parent=1 // pred_region
      _
    $region13: #{tpu_custom_call.1} parent=1 // pred_fallthru
      _
    // Predicated region
    $region14: #{tpu_custom_call.1} parent=1 // pred_check
      _
    $region15: #{tpu_custom_call.1} parent=1 // pred_check_branch
      %19 = sbr.rel (0) target = $region17
    $region16: #{tpu_custom_call.1} parent=1 // pred_region
      _
    $region17: #{tpu_custom_call.1} parent=1 // pred_fallthru
      _
    // Predicated region
    $region18: #{tpu_custom_call.1} parent=1 // pred_check
      _
    $region19: #{tpu_custom_call.1} parent=1 // pred_check_branch
      %21 = sbr.rel (0) target = $region21
    $region20: #{tpu_custom_call.1} parent=1 // pred_region
      _
    $region21: #{tpu_custom_call.1} parent=1 // pred_fallthru
      _
    // Predicated region
    $region22: #{tpu_custom_call.1} parent=1 // pred_check
      _
    $region23: #{tpu_custom_call.1} parent=1 // pred_check_branch
      %23 = sbr.rel (0) target = $region25
    $region24: #{tpu_custom_call.1} parent=1 // pred_region
      _
    $region25: #{tpu_custom_call.1} parent=1 // pred_fallthru
      _
    %v25 = vld [vmem:[%s0] sm:$0xf]
    %v26 = vld [vmem:[%s0 + $0x4] sm:$0xf]
    %v27 = vld [vmem:[%s4] sm:$0xf]
    %v28 = vld [vmem:[%s4 + $0x4] sm:$0xf]
    %v29 = vld [vmem:[%s4 + $0x8] sm:$0xf]
    %v30 = vld [vmem:[%s4 + $0xc] sm:$0xf]
    %v33 = vunpack.c.l.b16 %v25
    %v34 = vunpack.c.l.b16 %v26
    %v35 = vpack.c.b16 %v34, %v33
    %v40 = vunpack.c.l.b16 %v27
    %v41 = vunpack.c.l.b16 %v28
    %v42 = vunpack.c.l.b16 %v29
    %v43 = vunpack.c.l.b16 %v30
    %v44 = vpack.c.b16 %v41, %v40
    %v45 = vpack.c.b16 %v43, %v42
    %vm48 = vcmask 261120
    %v50 = vsel %vm48, %v35, 0
    %52 = vmatpush.bf16.msra.mxu0 0
    %53 = vmatpush.bf16.msra.mxu0 0
    %54 = vmatpush.bf16.msra.mxu0 0
    %55 = vmatpush.bf16.msra.mxu0 0
    %56 = vmatpush.bf16.msra.mxu0 0
    %57 = vmatpush.bf16.msra.mxu0 0
    %58 = vmatpush.bf16.msra.mxu0 %v45
    %59 = vmatpush.bf16.msra.mxu0 %v44
    %60 = vmatmul.bf16.gmra.mxu0 %v50
    %v61 = vpop.f32.mrf.mxu0
    %v62 = vadd.f32 0.0, %v61
    %v63 = vpop.f32.mrf.mxu0
    %v64 = vadd.f32 0.0, %v63
    %65 = vdwg.mxu0
    %v66 = vld [vmem:[%s2] sm:$0xff]
    %v67 = vld [vmem:[%s2 + $0x8] sm:$0xff]
    %69 = vset.pattern.permute.xlu0 0
    %70 = vperm.xlu0 %69, %v66
    %v71 = vpop.permute.xlu0 %70
    %74 = vset.pattern.permute.xlu0 0
    %75 = vperm.xlu0 %74, %v67
    %v76 = vpop.permute.xlu0 %75
    %v78 = vmul.f32 %v62, %v71
    %v79 = vmul.f32 %v64, %v76
    %v80 = vpack.c.bf16 %v79, %v78
    %v81 = vld [vmem:[%s1] sm:$0xf]
    %v82 = vld [vmem:[%s1 + $0x4] sm:$0xf]
    %v85 = vunpack.c.l.b16 %v81
    %v86 = vunpack.c.l.b16 %v82
    %v87 = vpack.c.b16 %v86, %v85
    %vm88 = vcmask 130048
    %v90 = vsel %vm88, %v87, 0
    %92 = vmatpush.bf16.msra.mxu0 0
    %93 = vmatpush.bf16.msra.mxu0 0
    %94 = vmatpush.bf16.msra.mxu0 0
    %95 = vmatpush.bf16.msra.mxu0 0
    %96 = vmatpush.bf16.msra.mxu0 0
    %97 = vmatpush.bf16.msra.mxu0 0
    %98 = vmatpush.bf16.msra.mxu0 0
    %99 = vmatpush.bf16.msra.mxu0 %v80
    %100 = vmatmul.bf16.gmra.mxu0 %v90
    %v101 = vpop.f32.mrf.mxu0
    %v102 = vadd.f32 0.0, %v101
    %v103 = vpop.f32.mrf.mxu0
    %v104 = vadd.f32 0.0, %v103
    %105 = vdwg.mxu0
    %v106 = vld [vmem:[%s3] sm:$0xff]
    %v107 = vld [vmem:[%s3 + $0x8] sm:$0xff]
    %109 = vset.pattern.permute.xlu0 0
    %110 = vperm.xlu0 %109, %v106
    %v111 = vpop.permute.xlu0 %110
    %114 = vset.pattern.permute.xlu0 0
    %115 = vperm.xlu0 %114, %v107
    %v116 = vpop.permute.xlu0 %115
    %v118 = vmul.f32 %v102, %v111
    %v119 = vmul.f32 %v104, %v116
    %v120 = vld [vmem:[%s5] sm:$0x1]
    %v122 = vperm.slane %v120, 0
    %v124 = vadd.f32 %v118, %v122
    %v125 = vadd.f32 %v119, %v122
    %vm126 = vcmp.gt.f32.partialorder %v124, 0.0
    %vm127 = vcmp.gt.f32.partialorder %v125, 0.0
    %v128 = vmul.f32 %v124, 0.01
    %v129 = vmul.f32 %v125, 0.01
    %v130 = vsel %vm126, %v124, %v128
    %v131 = vsel %vm127, %v125, %v129
    %132 = vst [vmem:[#allocation2] sm:$0xff] %v130
    %133 = vst [vmem:[#allocation2 + $0x8] sm:$0xff] %v131
    // Predicated region
    $region26: #{tpu_custom_call.1} parent=1 // pred_check
      _
    $region27: #{tpu_custom_call.1} parent=1 // pred_check_branch
      %135 = sbr.rel (0) target = $region29
    $region28: #{tpu_custom_call.1} parent=1 // pred_region
      %137 = vsyncadd [#allocation3], 0
      %s138 = sshll.u32 [#allocation2], 4
      %s139 = int_to_ptr.vmem [resolvable:$true] %s138
      %s140 = sshll.u32 %s6, 4
      %s141 = int_to_ptr.hbm [resolvable:$true] %s140
      %146 = dma.vmem_to_hbm [thread:$0]  %s139, 256, %s141, [#allocation3], 128, 128, 8
    $region29: #{tpu_custom_call.1} parent=1 // pred_fallthru
      _
    // Predicated region
    $region30: #{tpu_custom_call.1} parent=1 // pred_check
      _
    $region31: #{tpu_custom_call.1} parent=1 // pred_check_branch
      %148 = sbr.rel (0) target = $region33
    $region32: #{tpu_custom_call.1} parent=1 // pred_region
      %150 = dma.done [#allocation3], 256
    $region33: #{tpu_custom_call.1} parent=1 // pred_fallthru
      _
    %151 = vsyncpa [#allocation3], 1

</llo_original>
